<compile_context>
chip_gen: v6e
topology: v6e:2x2x1
jax: 0.10.0
libtpu: 0.0.40
codegen_flags: <defaults>
</compile_context>

<pallas_src>
import functools

import jax
import jax.numpy as jnp
from jax.experimental import pallas as pl
from jax.experimental.pallas import tpu as pltpu


# ----------------------------------------------------------------------------
# Kernels
# ----------------------------------------------------------------------------
def _fused_kernel(x_ref, o_ref, *, eps, inv_hw):
    """Single-pass instance norm: block holds the full spatial extent per row."""
    x = x_ref[...].astype(jnp.float32)
    mean = jnp.sum(x, axis=-1, keepdims=True) * inv_hw          # (rt, 1)
    xc = x - mean
    # Two-pass (centered) population variance: block is VMEM-resident, so the
    # extra pass is hidden under the HBM-bound DMA and avoids cancellation.
    var = jnp.sum(xc * xc, axis=-1, keepdims=True) * inv_hw      # (rt, 1)
    inv_std = jax.lax.rsqrt(var + eps)                           # tiny -> EUP
    o_ref[...] = (xc * inv_std).astype(o_ref.dtype)


def _stats_kernel(x_ref, mean_ref, invstd_ref, sum_ref, sumsq_ref,
                  *, eps, hw, chunk, inv_hw):
    """Chunked reduction over H*W: accumulate sum/sumsq, finalize on last chunk."""
    k = pl.program_id(1)

    @pl.when(k == 0)
    def _():
        sum_ref[...] = jnp.zeros_like(sum_ref)
        sumsq_ref[...] = jnp.zeros_like(sumsq_ref)

    x = x_ref[...].astype(jnp.float32)
    # Mask out-of-bounds columns of a partial final chunk (rows are independent,
    # so padded *rows* never contaminate anything and need no mask).
    col = k * chunk + jax.lax.broadcasted_iota(jnp.int32, x.shape, 1)
    x = jnp.where(col < hw, x, 0.0)

    sum_ref[...] = sum_ref[...] + jnp.sum(x, axis=-1, keepdims=True)
    sumsq_ref[...] = sumsq_ref[...] + jnp.sum(x * x, axis=-1, keepdims=True)

    @pl.when(k == pl.num_programs(1) - 1)
    def _():
        mean = sum_ref[...] * inv_hw
        var = jnp.maximum(sumsq_ref[...] * inv_hw - mean * mean, 0.0)
        mean_ref[...] = mean
        invstd_ref[...] = jax.lax.rsqrt(var + eps)


def _normalize_kernel(mean_ref, invstd_ref, x_ref, o_ref):
    """Elementwise normalize pass for the chunked path."""
    x = x_ref[...].astype(jnp.float32)
    o_ref[...] = ((x - mean_ref[...]) * invstd_ref[...]).astype(o_ref.dtype)


# ----------------------------------------------------------------------------
# Tiling / device heuristics
# ----------------------------------------------------------------------------
def _device_params():
    """Pick block-size target and scoped-VMEM limit per TPU generation."""
    try:
        kind = jax.devices()[0].device_kind.lower()
    except Exception:  # pragma: no cover - defensive
        kind = ""
    if ("v5" in kind) or ("v6" in kind):
        # 128 MiB VMEM parts: ~8 MiB blocks (2 specs x 2 bufs = 32 MiB) plus
        # generous headroom for in-kernel f32 temporaries.
        return {"target_block_bytes": 8 * 1024 * 1024,
                "vmem_limit_bytes": 64 * 1024 * 1024}
    # v7x (64 MiB physical VMEM) or unknown: stay safely under the ceiling.
    return {"target_block_bytes": 6 * 1024 * 1024,
            "vmem_limit_bytes": 44 * 1024 * 1024}


def _choose_row_tile(rows: int, hw: int, target_elems: int) -> int:
    """Largest sublane-multiple row tile such that row_tile*hw ~= target_elems."""
    t = max(1, target_elems // max(hw, 1))
    t = max(8, (t // 8) * 8)                 # sublane multiple, >= 8
    rows_up = ((rows + 7) // 8) * 8
    return min(t, rows_up)


# ----------------------------------------------------------------------------
# pallas_call wrappers
# ----------------------------------------------------------------------------
def _instance_norm_fused(x2, eps, row_tile, vmem_limit):
    rows, hw = x2.shape
    itemsize = x2.dtype.itemsize
    kernel = functools.partial(_fused_kernel, eps=eps, inv_hw=1.0 / hw)
    return pl.pallas_call(
        kernel,
        out_shape=jax.ShapeDtypeStruct((rows, hw), x2.dtype),
        grid_spec=pltpu.PrefetchScalarGridSpec(
            num_scalar_prefetch=0,
            grid=(pl.cdiv(rows, row_tile),),
            in_specs=[pl.BlockSpec((row_tile, hw), lambda i: (i, 0))],
            out_specs=pl.BlockSpec((row_tile, hw), lambda i: (i, 0)),
        ),
        compiler_params=pltpu.CompilerParams(
            dimension_semantics=("parallel",),   # shards rows across TCs on v7x
            vmem_limit_bytes=vmem_limit,
        ),
        cost_estimate=pl.CostEstimate(
            flops=6 * rows * hw,
            transcendentals=rows,
            bytes_accessed=2 * rows * hw * itemsize,
        ),
    )(x2)


def _instance_norm_chunked(x2, eps, row_tile, chunk, vmem_limit):
    rows, hw = x2.shape
    itemsize = x2.dtype.itemsize
    inv_hw = 1.0 / hw
    n_row_blocks = pl.cdiv(rows, row_tile)
    n_chunks = pl.cdiv(hw, chunk)

    # Pass 1: per-row mean / inv_std via chunked sum + sumsq reduction.
    stats_kernel = functools.partial(
        _stats_kernel, eps=eps, hw=hw, chunk=chunk, inv_hw=inv_hw)
    mean, inv_std = pl.pallas_call(
        stats_kernel,
        out_shape=(jax.ShapeDtypeStruct((rows, 1), jnp.float32),
                   jax.ShapeDtypeStruct((rows, 1), jnp.float32)),
        grid_spec=pltpu.PrefetchScalarGridSpec(
            num_scalar_prefetch=0,
            grid=(n_row_blocks, n_chunks),
            in_specs=[pl.BlockSpec((row_tile, chunk), lambda i, k: (i, k))],
            out_specs=(pl.BlockSpec((row_tile, 1), lambda i, k: (i, 0)),
                       pl.BlockSpec((row_tile, 1), lambda i, k: (i, 0))),
            scratch_shapes=[pltpu.VMEM((row_tile, 1), jnp.float32),
                            pltpu.VMEM((row_tile, 1), jnp.float32)],
        ),
        compiler_params=pltpu.CompilerParams(
            dimension_semantics=("parallel", "arbitrary"),
            vmem_limit_bytes=vmem_limit,
        ),
        cost_estimate=pl.CostEstimate(
            flops=3 * rows * hw,
            transcendentals=rows,
            bytes_accessed=rows * hw * itemsize,
        ),
    )(x2)

    # Pass 2: elementwise normalization, chunked the same way.
    out = pl.pallas_call(
        _normalize_kernel,
        out_shape=jax.ShapeDtypeStruct((rows, hw), x2.dtype),
        grid_spec=pltpu.PrefetchScalarGridSpec(
            num_scalar_prefetch=0,
            grid=(n_row_blocks, n_chunks),
            in_specs=[pl.BlockSpec((row_tile, 1), lambda i, k: (i, 0)),
                      pl.BlockSpec((row_tile, 1), lambda i, k: (i, 0)),
                      pl.BlockSpec((row_tile, chunk), lambda i, k: (i, k))],
            out_specs=pl.BlockSpec((row_tile, chunk), lambda i, k: (i, k)),
        ),
        compiler_params=pltpu.CompilerParams(
            dimension_semantics=("parallel", "parallel"),
            vmem_limit_bytes=vmem_limit,
        ),
        cost_estimate=pl.CostEstimate(
            flops=2 * rows * hw,
            transcendentals=0,
            bytes_accessed=2 * rows * hw * itemsize,
        ),
    )(mean, inv_std, x2)
    return out


def instance_norm(x: jax.Array, eps: float = 1e-5) -> jax.Array:
    """x: (N, C, H, W) -> instance-normalized tensor, same shape/dtype."""
    N, C, H, W = x.shape
    rows = N * C
    hw = H * W
    x2 = x.reshape(rows, hw)                       # free row-major view

    cfg = _device_params()
    vmem_limit = cfg["vmem_limit_bytes"]
    bytes_per_elem = max(x.dtype.itemsize, 4)      # kernel computes in f32
    target_elems = max(cfg["target_block_bytes"] // bytes_per_elem, 8 * 128)

    if 8 * hw <= target_elems:
        # Full spatial extent of >=8 rows fits in one block: fused single-pass.
        row_tile = _choose_row_tile(rows, hw, target_elems)
        out = _instance_norm_fused(x2, eps, row_tile, vmem_limit)
    else:
        # Huge spatial dims: chunk H*W (128-multiple chunks) and do two passes.
        row_tile = 8
        chunk = (target_elems // row_tile) // 128 * 128
        chunk = max(128, min(chunk, (hw // 128) * 128))
        out = _instance_norm_chunked(x2, eps, row_tile, chunk, vmem_limit)

    return out.reshape(N, C, H, W)


class ModelNew:
    """Instance Normalization (eps=1e-5, no affine) with Pallas TPU kernels."""

    def __init__(self, num_features: int):
        self.num_features = num_features
        self.eps = 1e-5

    def __call__(self, x: jax.Array) -> jax.Array:
        return instance_norm(x, self.eps)


if __name__ == "__main__":
    key = jax.random.PRNGKey(0)
    N, C, H, W = 2, 4, 16, 16
    x = jax.random.normal(key, (N, C, H, W), dtype=jnp.float32)

    # Reference in plain JAX (population variance, matching torch.var(..., False)).
    mean = jnp.mean(x, axis=(2, 3), keepdims=True)
    var = jnp.mean((x - mean) ** 2, axis=(2, 3), keepdims=True)
    ref = (x - mean) / jnp.sqrt(var + 1e-5)

    # Primary (fused) path.
    model = ModelNew(num_features=C)
    out = jax.block_until_ready(model(x))
    assert out.shape == x.shape
    assert jnp.max(jnp.abs(out - ref)) < 1e-4, "fused path mismatch vs reference"

    # Exercise the HW-chunked fallback path with small forced tiles.
    x2 = x.reshape(N * C, H * W)
    out_chunked = _instance_norm_chunked(
        x2, 1e-5, row_tile=8, chunk=128,
        vmem_limit=_device_params()["vmem_limit_bytes"])
    out_chunked = jax.block_until_ready(out_chunked).reshape(N, C, H, W)
    assert jnp.max(jnp.abs(out_chunked - ref)) < 1e-4, "chunked path mismatch"

    print("KERNEL_OK")
</pallas_src>

<mosaic_0001>
module attributes {stable_mosaic.version = 11 : i64} {
  func.func @_fused_kernel(%arg0: i32, %arg1: memref<8x256xf32, #tpu.memory_space<vmem>>, %arg2: memref<8x256xf32, #tpu.memory_space<vmem>>) attributes {dimension_semantics = [#tpu.dimension_semantics<parallel>], iteration_bounds = array<i64: 1>, scalar_prefetch = 0 : i64, scratch_operands = 0 : i64, tpu.core_type = #tpu.core_type<tc>, window_params = [{transform_indices = @transform_0, window_bounds = array<i64: 8, 256>}, {transform_indices = @transform_1, window_bounds = array<i64: 8, 256>}]} {
    %c0 = arith.constant 0 : index
    %c0_0 = arith.constant 0 : index
    %0 = vector.load %arg1[%c0, %c0_0] : memref<8x256xf32, #tpu.memory_space<vmem>>, vector<8x256xf32>
    %cst = arith.constant dense<0.000000e+00> : vector<8xf32>
    %1 = vector.multi_reduction <add>, %0, %cst [1] : vector<8x256xf32> to vector<8xf32>
    %2 = vector.shape_cast %1 : vector<8xf32> to vector<8x1xf32>
    %cst_1 = arith.constant 3.906250e-03 : f32
    %3 = vector.broadcast %cst_1 : f32 to vector<8x1xf32>
    %4 = arith.mulf %2, %3 : vector<8x1xf32>
    %5 = vector.broadcast %4 : vector<8x1xf32> to vector<8x256xf32>
    %6 = arith.subf %0, %5 : vector<8x256xf32>
    %7 = arith.mulf %6, %6 : vector<8x256xf32>
    %cst_2 = arith.constant dense<0.000000e+00> : vector<8xf32>
    %8 = vector.multi_reduction <add>, %7, %cst_2 [1] : vector<8x256xf32> to vector<8xf32>
    %9 = vector.shape_cast %8 : vector<8xf32> to vector<8x1xf32>
    %cst_3 = arith.constant 3.906250e-03 : f32
    %10 = vector.broadcast %cst_3 : f32 to vector<8x1xf32>
    %11 = arith.mulf %9, %10 : vector<8x1xf32>
    %cst_4 = arith.constant 9.99999974E-6 : f32
    %12 = vector.broadcast %cst_4 : f32 to vector<8x1xf32>
    %13 = arith.addf %11, %12 : vector<8x1xf32>
    %14 = math.rsqrt %13 : vector<8x1xf32>
    %15 = vector.broadcast %14 : vector<8x1xf32> to vector<8x256xf32>
    %16 = arith.mulf %6, %15 : vector<8x256xf32>
    %c0_5 = arith.constant 0 : index
    %c0_6 = arith.constant 0 : index
    %17 = vector.load %arg2[%c0_5, %c0_6] : memref<8x256xf32, #tpu.memory_space<vmem>>, vector<8x256xf32>
    tpu.vector_store %arg2[%c0_5, %c0_6], %16 {strides = array<i32>} : memref<8x256xf32, #tpu.memory_space<vmem>>, vector<8x256xf32>,
    return
  }
  func.func @transform_0(%arg0: i32) -> (i32, i32) {
    %c0_i32 = arith.constant 0 : i32
    %c0_i32_0 = arith.constant 0 : i32
    return %arg0, %c0_i32 : i32, i32
  }
  func.func @transform_1(%arg0: i32) -> (i32, i32) {
    %c0_i32 = arith.constant 0 : i32
    %c0_i32_0 = arith.constant 0 : i32
    return %arg0, %c0_i32 : i32, i32
  }
}

</mosaic_0001>

<llo_original>
// kernel: tpu_custom_call.1
$region0: #{tpu_custom_call.1}
  #allocation0 [shape = 'u32[]', space=smem, size = 0x4, offset = 0x4, fixed_abs, tag = 'smem constant byte address 0x4 - core index']
  #allocation1 [shape = 'u32[144,128]{1,0:T(1,128)}', space=vmem, size = 0x12000, scoped, tag = 'internal scratch']
  %s0 = inlined_call_operand.hbm [shape: f32[8,256], index: 0, kind: input, shape index: {}]
  %s1 = inlined_call_operand.hbm [shape: f32[8,256], index: 1, kind: output, shape index: {}]
  %s2 = sld [smem:[#allocation0]]
  $region18: #{tpu_custom_call.1} parent=0
    _
  %s4 = ssub.s32 1, %s2
  %s5 = scalar_select 0, %s4, %s2
  $region1: #{tpu_custom_call.1} parent=0
    #allocation2 [shape = 'u8[8192]{0}', space=vmem, size = 0x2000, scoped, tag = 'input window, operand 0, single buffered']
    #allocation3 [shape = 's32[1]{0}', space=sflag, size = 0x4, scoped, tag = 'scoped memory for tpu_custom_call.1']
    #allocation4 [shape = 's32[1]{0}', space=sflag, size = 0x4, scoped, tag = 'scoped memory for tpu_custom_call.1']
    #allocation5 [shape = 'u8[8192]{0}', space=vmem, size = 0x2000, scoped, tag = 'output window, operand 0, single buffered']
    %6 = vsyncpa [#allocation3], 0
    %7 = vsyncpa [#allocation4], 0
    // Predicated region
    $region2: #{tpu_custom_call.1} parent=1 // pred_check
      _
    $region3: #{tpu_custom_call.1} parent=1 // pred_check_branch
      %9 = sbr.rel (0) target = $region5
    $region4: #{tpu_custom_call.1} parent=1 // pred_region
      %s11 = ssub.s32 256, 256
      %12 = vsyncadd [#allocation3], %s11
      %s14 = sshll.u32 [#allocation2], 4
      %s15 = int_to_ptr.vmem [resolvable:$true] %s14
      %17 = dma.hbm_to_vmem [thread:$0]  %s0, 256, %s15, [#allocation3]
    $region5: #{tpu_custom_call.1} parent=1 // pred_fallthru
      _
    // Predicated region
    $region6: #{tpu_custom_call.1} parent=1 // pred_check
      _
    $region7: #{tpu_custom_call.1} parent=1 // pred_check_branch
      %19 = sbr.rel (0) target = $region9
    $region8: #{tpu_custom_call.1} parent=1 // pred_region
      %20 = dma.done [#allocation3], 256
    $region9: #{tpu_custom_call.1} parent=1 // pred_fallthru
      _
    %v21 = vld [vmem:[#allocation2] sm:$0xff]
    %v22 = vld [vmem:[#allocation2 + $0x8] sm:$0xff]
    %v23 = vadd.f32 %v21, %v22
    %24 = vadd.xlane.f32.xlu0 %v23
    %v25 = vpop.xlane.xlu0 %24
    %v26 = vmul.f32 %v25, 0.00390625
    %v27 = vsub.f32 %v21, %v26
    %v28 = vsub.f32 %v22, %v26
    %v29 = vmul.f32 %v27, %v27
    %v30 = vmul.f32 %v28, %v28
    %v31 = vadd.f32 %v29, %v30
    %32 = vadd.xlane.f32.xlu0 %v31
    %v33 = vpop.xlane.xlu0 %32
    %v34 = vmul.f32 %v33, 0.00390625
    %v35 = vadd.f32 %v34, 1e-05
    %v36 = vrsqrt.pop %v35
    %v37 = vmul.f32 %v27, %v36
    %v38 = vmul.f32 %v28, %v36
    %39 = vst [vmem:[#allocation5] sm:$0xff] %v37
    %40 = vst [vmem:[#allocation5 + $0x8] sm:$0xff] %v38
    // Predicated region
    $region10: #{tpu_custom_call.1} parent=1 // pred_check
      _
    $region11: #{tpu_custom_call.1} parent=1 // pred_check_branch
      %42 = sbr.rel (0) target = $region13
    $region12: #{tpu_custom_call.1} parent=1 // pred_region
      %s44 = ssub.s32 256, 256
      %45 = vsyncadd [#allocation4], %s44
      %s47 = sshll.u32 [#allocation5], 4
      %s48 = int_to_ptr.vmem [resolvable:$true] %s47
      %50 = dma.vmem_to_hbm [thread:$0]  %s48, 256, %s1, [#allocation4]
    $region13: #{tpu_custom_call.1} parent=1 // pred_fallthru
      _
    // Predicated region
    $region14: #{tpu_custom_call.1} parent=1 // pred_check
      _
    $region15: #{tpu_custom_call.1} parent=1 // pred_check_branch
      %52 = sbr.rel (0) target = $region17
    $region16: #{tpu_custom_call.1} parent=1 // pred_region
      %53 = dma.done [#allocation4], 256
    $region17: #{tpu_custom_call.1} parent=1 // pred_fallthru
      _
    %54 = vsyncpa [#allocation3], 1
    %55 = vsyncpa [#allocation4], 1

</llo_original>
